<compile_context>
chip_gen: v7x
topology: tpu7x:2x2x1
jax: 0.10.0
libtpu: 0.0.40
codegen_flags: <defaults>
</compile_context>

<pallas_src>
from typing import Dict, List, Sequence, Tuple

import jax
import jax.numpy as jnp
from jax.experimental import pallas as pl
from jax.experimental.pallas import tpu as pltpu


LANE = 128                               # pad the active-slot axis to this
MAX_TB = 2048                            # max batch-tile rows
VMEM_WS_BUDGET = 24 * 1024 * 1024        # target double-buffered working set
VMEM_LIMIT_CAP = 64 * 1024 * 1024        # v7x physical VMEM per TensorCore


def _round_up(x: int, m: int) -> int:
    return ((x + m - 1) // m) * m


# ---------------------------------------------------------------------------
# Pallas kernel: fused column-gather + normalize + clamp + mask + {x, x^2, sqrt}
# ---------------------------------------------------------------------------
def _make_autodis_kernel(runs: Sequence[Tuple[int, int, int]],
                         num_active: int, n_pad: int):
    """Bake the trace-time-constant column gather into the kernel body.

    runs: (src_col, dst_col, length) contiguous runs of active feature columns.
    """

    def kernel(feat_ref, params_ref, out_ref):
        # feat_ref:   (TB, F)        raw features block (gather fused in-kernel)
        # params_ref: (2, n_pad)     row 0 = per-slot min, row 1 = 1/(max-min)
        # out_ref:    (3, TB, n_pad) fused lane-dense [norm, norm^2, sqrt(norm)]
        for src, dst, length in runs:
            d = feat_ref[:, src:src + length]            # static lane slice
            cmin = params_ref[0:1, dst:dst + length]
            inv_r = params_ref[1:2, dst:dst + length]
            # Multiply by the precomputed reciprocal range (no divide). Zero
            # range -> inf; x == min then yields 0*inf = NaN, matching torch.
            norm = jnp.clip((d - cmin) * inv_r, 0.0, 1.0)
            # Sentinel / NaN masking on the RAW values, exactly like torch.
            invalid = (d == -1.0) | jnp.isnan(d)
            norm = jnp.where(invalid, 0.0, norm)
            out_ref[0, :, dst:dst + length] = norm
            out_ref[1, :, dst:dst + length] = norm * norm
            out_ref[2, :, dst:dst + length] = jnp.sqrt(norm)
        if n_pad > num_active:
            # Deterministic zeros in the padded lanes (sliced off downstream,
            # but avoids exposing stale VMEM if that slice is ever dropped).
            z = jnp.zeros((feat_ref.shape[0], n_pad - num_active), jnp.float32)
            out_ref[0, :, num_active:n_pad] = z
            out_ref[1, :, num_active:n_pad] = z
            out_ref[2, :, num_active:n_pad] = z

    return kernel


def _pick_batch_tile(batch: int, f_lanes: int, n_pad: int) -> int:
    """Largest sublane-aligned batch tile whose double-buffered working set
    (input block + 3 fused output planes) fits the budget.  Prefers >= 2 grid
    steps for batch >= 16 (v7x megacore) and a tile dividing the batch."""
    per_row = 2 * 4 * (f_lanes + 3 * n_pad)       # 2 buffers * 4 B * lanes/row
    tb = min(MAX_TB, max(8, VMEM_WS_BUDGET // per_row))
    if tb >= batch:
        if batch < 16:
            return batch                           # too small to split
        tb = _round_up(-(-batch // 2), 8)          # >= 2 steps for 2 TCs
    tb = max(8, (tb // 8) * 8)
    for cand in range(tb, 7, -8):                  # snap to a divisor of batch
        if batch % cand == 0:
            return cand
    return tb                                      # accept a masked tail block


def autodis_forward(features, params, runs, num_active_slot, n_pad):
    """JAX/Pallas equivalent of AutoDisPreprocessor.forward.

    features: (B, feature_num) float32 raw features (gather happens in-kernel)
    params:   (2, n_pad) float32  [per-slot min ; per-slot 1/(max-min)]
    runs:     static tuple of (src_col, dst_col, length) active-column runs
    returns: (auto_dis_input (B, N, 3), feature_dense_norm (B, N))
    """
    B, F = features.shape
    f_lanes = _round_up(F, LANE)                   # VMEM lane footprint per row
    TB = _pick_batch_tile(B, f_lanes, n_pad)
    grid = (pl.cdiv(B, TB),)

    # Explicit VMEM limit derived from the actual double-buffered working set.
    ws = 2 * (TB * f_lanes * 4 + 3 * TB * n_pad * 4) + 2 * (2 * n_pad * 4)
    vmem_limit = int(min(VMEM_LIMIT_CAP, max(16 * 1024 * 1024, 2 * ws)))

    kernel = _make_autodis_kernel(runs, num_active_slot, n_pad)
    stacked = pl.pallas_call(
        kernel,
        out_shape=jax.ShapeDtypeStruct((3, B, n_pad), jnp.float32),
        grid=grid,
        in_specs=[
            pl.BlockSpec((TB, F), lambda i: (i, 0)),        # raw features
            pl.BlockSpec((2, n_pad), lambda i: (0, 0)),     # fused min / 1/range
        ],
        out_specs=pl.BlockSpec((3, TB, n_pad), lambda i: (0, i, 0)),
        compiler_params=pltpu.CompilerParams(
            dimension_semantics=("parallel",),
            vmem_limit_bytes=vmem_limit,
        ),
        cost_estimate=pl.CostEstimate(
            flops=8 * B * num_active_slot,
            transcendentals=B * num_active_slot,
            bytes_accessed=B * F * 4 + 3 * B * n_pad * 4 + 2 * n_pad * 4,
        ),
    )(features, params)

    n = num_active_slot
    feature_dense_norm = stacked[0, :, :n]                       # (B, N)
    # TODO(synk): downstream consumers should read the lane-dense (3, B, N)
    # slab directly (fold this permutation into their dot_general / embedding
    # dimension_numbers); the moveaxis below exists only to preserve the
    # torch.stack(..., dim=2) output contract of the original module.
    auto_dis_input = jnp.moveaxis(stacked[:, :, :n], 0, 2)       # (B, N, 3)
    return auto_dis_input, feature_dense_norm


# ---------------------------------------------------------------------------
# Deterministic "config" / parameter construction (mirrors __init__)
# ---------------------------------------------------------------------------
def build_preprocessor_params(feature_num: int,
                              slot_mask: List[int],
                              min_max_mapping: Dict[str, List[float]]):
    active_slot = sorted(i for i in range(feature_num) if i not in slot_mask)
    n = len(active_slot)
    n_pad = max(LANE, _round_up(n, LANE))

    # Compress the static active-slot gather into contiguous source runs.
    # Typical configs (small slot_mask) give only a handful of runs.
    runs: List[Tuple[int, int, int]] = []
    if active_slot:
        start = prev = active_slot[0]
        dst = 0
        for s in active_slot[1:]:
            if s == prev + 1:
                prev = s
                continue
            runs.append((start, dst, prev - start + 1))
            dst += prev - start + 1
            start = prev = s
        runs.append((start, dst, prev - start + 1))

    cmin = [float(min_max_mapping.get(str(s), [0.0, 1.0])[0]) for s in active_slot]
    cmax = [float(min_max_mapping.get(str(s), [0.0, 1.0])[1]) for s in active_slot]
    pad = n_pad - n
    cmin_arr = jnp.asarray(cmin + [0.0] * pad, dtype=jnp.float32)
    cmax_arr = jnp.asarray(cmax + [1.0] * pad, dtype=jnp.float32)
    # NOTE: a zero range yields inf here, matching PyTorch's divide-by-zero
    # behaviour ((x - min) / 0) followed by the clamp.
    inv_range = 1.0 / (cmax_arr - cmin_arr)
    params = jnp.stack([cmin_arr, inv_range], axis=0)            # (2, n_pad)
    return params, tuple(runs), n, n_pad


if __name__ == "__main__":
    # Small synthetic config.
    feature_num = 16
    slot_mask = [1, 5, 9]
    min_max_mapping = {
        "0": [0.0, 10.0],
        "2": [-5.0, 5.0],
        "3": [1.0, 3.0],
        "6": [0.0, 100.0],
        "8": [-1.0, 1.0],
        "12": [2.0, 4.0],
        # other active slots fall back to [0, 1]
    }

    params, runs, n_active, n_pad = build_preprocessor_params(
        feature_num, slot_mask, min_max_mapping)

    # Deterministic example input: batch=2, feature_num=16.
    key = jax.random.PRNGKey(0)
    B = 2
    features = jax.random.uniform(
        key, (B, feature_num), dtype=jnp.float32, minval=-6.0, maxval=12.0)
    # Inject a sentinel -1 and a NaN to exercise the masking path.
    features = features.at[0, 2].set(-1.0)
    features = features.at[1, 7].set(jnp.nan)

    auto_dis_input, feature_dense_norm = autodis_forward(
        features, params, runs, n_active, n_pad)
    jax.block_until_ready((auto_dis_input, feature_dense_norm))

    # Pure-JAX reference (unpadded slots) for sanity checking.
    active_slot = jnp.asarray(
        sorted(i for i in range(feature_num) if i not in slot_mask),
        dtype=jnp.int32)
    dense = jnp.take(features, active_slot, axis=1)
    cmin_ref = params[0:1, :n_active]
    inv_ref = params[1:2, :n_active]
    ref_norm = jnp.clip((dense - cmin_ref) * inv_ref, 0.0, 1.0)
    ref_norm = jnp.where((dense == -1.0) | jnp.isnan(dense), 0.0, ref_norm)
    ref_stack = jnp.stack([ref_norm, ref_norm * ref_norm, jnp.sqrt(ref_norm)],
                          axis=2)

    assert auto_dis_input.shape == (B, n_active, 3)
    assert feature_dense_norm.shape == (B, n_active)
    assert jnp.allclose(feature_dense_norm, ref_norm, atol=1e-6)
    assert jnp.allclose(auto_dis_input, ref_stack, atol=1e-6)

    print("KERNEL_OK")
</pallas_src>

<mosaic_0001>
module attributes {stable_mosaic.version = 11 : i64} {
  func.func @kernel(%arg0: i32, %arg1: memref<2x16xf32, #tpu.memory_space<vmem>>, %arg2: memref<2x128xf32, #tpu.memory_space<vmem>>, %arg3: memref<3x2x128xf32, #tpu.memory_space<vmem>>) attributes {dimension_semantics = [#tpu.dimension_semantics<parallel>], iteration_bounds = array<i64: 1>, scalar_prefetch = 0 : i64, scratch_operands = 0 : i64, tpu.core_type = #tpu.core_type<tc>, window_params = [{transform_indices = @transform_0, window_bounds = array<i64: 2, 16>}, {pipeline_mode = #tpu.pipeline_mode<synchronous>, transform_indices = @transform_1, window_bounds = array<i64: 2, 128>}, {transform_indices = @transform_2, window_bounds = array<i64: 3, 2, 128>}]} {
    %c0 = arith.constant 0 : index
    %c0_0 = arith.constant 0 : index
    %0 = vector.load %arg1[%c0, %c0_0] : memref<2x16xf32, #tpu.memory_space<vmem>>, vector<2x1xf32>
    %c0_1 = arith.constant 0 : index
    %c0_2 = arith.constant 0 : index
    %1 = vector.load %arg2[%c0_1, %c0_2] : memref<2x128xf32, #tpu.memory_space<vmem>>, vector<1x1xf32>
    %c1 = arith.constant 1 : index
    %c0_3 = arith.constant 0 : index
    %2 = vector.load %arg2[%c1, %c0_3] : memref<2x128xf32, #tpu.memory_space<vmem>>, vector<1x1xf32>
    %3 = vector.broadcast %1 : vector<1x1xf32> to vector<2x1xf32>
    %4 = arith.subf %0, %3 : vector<2x1xf32>
    %5 = vector.broadcast %2 : vector<1x1xf32> to vector<2x1xf32>
    %6 = arith.mulf %4, %5 : vector<2x1xf32>
    %cst = arith.constant 0.000000e+00 : f32
    %cst_4 = arith.constant 1.000000e+00 : f32
    %7 = vector.broadcast %cst : f32 to vector<2x1xf32>
    %8 = arith.maximumf %7, %6 : vector<2x1xf32>
    %9 = vector.broadcast %cst_4 : f32 to vector<2x1xf32>
    %10 = arith.minimumf %9, %8 : vector<2x1xf32>
    %cst_5 = arith.constant -1.000000e+00 : f32
    %11 = vector.broadcast %cst_5 : f32 to vector<2x1xf32>
    %12 = arith.cmpf oeq, %0, %11 : vector<2x1xf32>
    %13 = arith.cmpf one, %0, %0 : vector<2x1xf32>
    %14 = arith.ori %12, %13 : vector<2x1xi1>
    %cst_6 = arith.constant 0.000000e+00 : f32
    %15 = vector.broadcast %cst_6 : f32 to vector<2x1xf32>
    %16 = arith.select %14, %15, %10 : vector<2x1xi1>, vector<2x1xf32>
    %c0_7 = arith.constant 0 : index
    %c0_8 = arith.constant 0 : index
    %c0_9 = arith.constant 0 : index
    %17 = vector.load %arg3[%c0_7, %c0_8, %c0_9] : memref<3x2x128xf32, #tpu.memory_space<vmem>>, vector<1x2x1xf32>
    %18 = vector.shape_cast %17 : vector<1x2x1xf32> to vector<2x1xf32>
    %19 = vector.shape_cast %16 : vector<2x1xf32> to vector<1x2x1xf32>
    tpu.vector_store %arg3[%c0_7, %c0_8, %c0_9], %19 {strides = array<i32>} : memref<3x2x128xf32, #tpu.memory_space<vmem>>, vector<1x2x1xf32>,
    %20 = arith.mulf %16, %16 : vector<2x1xf32>
    %c1_10 = arith.constant 1 : index
    %c0_11 = arith.constant 0 : index
    %c0_12 = arith.constant 0 : index
    %21 = vector.load %arg3[%c1_10, %c0_11, %c0_12] : memref<3x2x128xf32, #tpu.memory_space<vmem>>, vector<1x2x1xf32>
    %22 = vector.shape_cast %21 : vector<1x2x1xf32> to vector<2x1xf32>
    %23 = vector.shape_cast %20 : vector<2x1xf32> to vector<1x2x1xf32>
    tpu.vector_store %arg3[%c1_10, %c0_11, %c0_12], %23 {strides = array<i32>} : memref<3x2x128xf32, #tpu.memory_space<vmem>>, vector<1x2x1xf32>,
    %24 = math.sqrt %16 : vector<2x1xf32>
    %c2 = arith.constant 2 : index
    %c0_13 = arith.constant 0 : index
    %c0_14 = arith.constant 0 : index
    %25 = vector.load %arg3[%c2, %c0_13, %c0_14] : memref<3x2x128xf32, #tpu.memory_space<vmem>>, vector<1x2x1xf32>
    %26 = vector.shape_cast %25 : vector<1x2x1xf32> to vector<2x1xf32>
    %27 = vector.shape_cast %24 : vector<2x1xf32> to vector<1x2x1xf32>
    tpu.vector_store %arg3[%c2, %c0_13, %c0_14], %27 {strides = array<i32>} : memref<3x2x128xf32, #tpu.memory_space<vmem>>, vector<1x2x1xf32>,
    %c0_15 = arith.constant 0 : index
    %c2_16 = arith.constant 2 : index
    %28 = vector.load %arg1[%c0_15, %c2_16] : memref<2x16xf32, #tpu.memory_space<vmem>>, vector<2x3xf32>
    %c0_17 = arith.constant 0 : index
    %c1_18 = arith.constant 1 : index
    %29 = vector.load %arg2[%c0_17, %c1_18] : memref<2x128xf32, #tpu.memory_space<vmem>>, vector<1x3xf32>
    %c1_19 = arith.constant 1 : index
    %c1_20 = arith.constant 1 : index
    %30 = vector.load %arg2[%c1_19, %c1_20] : memref<2x128xf32, #tpu.memory_space<vmem>>, vector<1x3xf32>
    %31 = vector.broadcast %29 : vector<1x3xf32> to vector<2x3xf32>
    %32 = arith.subf %28, %31 : vector<2x3xf32>
    %33 = vector.broadcast %30 : vector<1x3xf32> to vector<2x3xf32>
    %34 = arith.mulf %32, %33 : vector<2x3xf32>
    %cst_21 = arith.constant 0.000000e+00 : f32
    %cst_22 = arith.constant 1.000000e+00 : f32
    %35 = vector.broadcast %cst_21 : f32 to vector<2x3xf32>
    %36 = arith.maximumf %35, %34 : vector<2x3xf32>
    %37 = vector.broadcast %cst_22 : f32 to vector<2x3xf32>
    %38 = arith.minimumf %37, %36 : vector<2x3xf32>
    %cst_23 = arith.constant -1.000000e+00 : f32
    %39 = vector.broadcast %cst_23 : f32 to vector<2x3xf32>
    %40 = arith.cmpf oeq, %28, %39 : vector<2x3xf32>
    %41 = arith.cmpf one, %28, %28 : vector<2x3xf32>
    %42 = arith.ori %40, %41 : vector<2x3xi1>
    %cst_24 = arith.constant 0.000000e+00 : f32
    %43 = vector.broadcast %cst_24 : f32 to vector<2x3xf32>
    %44 = arith.select %42, %43, %38 : vector<2x3xi1>, vector<2x3xf32>
    %c0_25 = arith.constant 0 : index
    %c0_26 = arith.constant 0 : index
    %c1_27 = arith.constant 1 : index
    %45 = vector.load %arg3[%c0_25, %c0_26, %c1_27] : memref<3x2x128xf32, #tpu.memory_space<vmem>>, vector<1x2x3xf32>
    %46 = vector.shape_cast %45 : vector<1x2x3xf32> to vector<2x3xf32>
    %47 = vector.shape_cast %44 : vector<2x3xf32> to vector<1x2x3xf32>
    tpu.vector_store %arg3[%c0_25, %c0_26, %c1_27], %47 {strides = array<i32>} : memref<3x2x128xf32, #tpu.memory_space<vmem>>, vector<1x2x3xf32>,
    %48 = arith.mulf %44, %44 : vector<2x3xf32>
    %c1_28 = arith.constant 1 : index
    %c0_29 = arith.constant 0 : index
    %c1_30 = arith.constant 1 : index
    %49 = vector.load %arg3[%c1_28, %c0_29, %c1_30] : memref<3x2x128xf32, #tpu.memory_space<vmem>>, vector<1x2x3xf32>
    %50 = vector.shape_cast %49 : vector<1x2x3xf32> to vector<2x3xf32>
    %51 = vector.shape_cast %48 : vector<2x3xf32> to vector<1x2x3xf32>
    tpu.vector_store %arg3[%c1_28, %c0_29, %c1_30], %51 {strides = array<i32>} : memref<3x2x128xf32, #tpu.memory_space<vmem>>, vector<1x2x3xf32>,
    %52 = math.sqrt %44 : vector<2x3xf32>
    %c2_31 = arith.constant 2 : index
    %c0_32 = arith.constant 0 : index
    %c1_33 = arith.constant 1 : index
    %53 = vector.load %arg3[%c2_31, %c0_32, %c1_33] : memref<3x2x128xf32, #tpu.memory_space<vmem>>, vector<1x2x3xf32>
    %54 = vector.shape_cast %53 : vector<1x2x3xf32> to vector<2x3xf32>
    %55 = vector.shape_cast %52 : vector<2x3xf32> to vector<1x2x3xf32>
    tpu.vector_store %arg3[%c2_31, %c0_32, %c1_33], %55 {strides = array<i32>} : memref<3x2x128xf32, #tpu.memory_space<vmem>>, vector<1x2x3xf32>,
    %c0_34 = arith.constant 0 : index
    %c6 = arith.constant 6 : index
    %56 = vector.load %arg1[%c0_34, %c6] : memref<2x16xf32, #tpu.memory_space<vmem>>, vector<2x3xf32>
    %c0_35 = arith.constant 0 : index
    %c4 = arith.constant 4 : index
    %57 = vector.load %arg2[%c0_35, %c4] : memref<2x128xf32, #tpu.memory_space<vmem>>, vector<1x3xf32>
    %c1_36 = arith.constant 1 : index
    %c4_37 = arith.constant 4 : index
    %58 = vector.load %arg2[%c1_36, %c4_37] : memref<2x128xf32, #tpu.memory_space<vmem>>, vector<1x3xf32>
    %59 = vector.broadcast %57 : vector<1x3xf32> to vector<2x3xf32>
    %60 = arith.subf %56, %59 : vector<2x3xf32>
    %61 = vector.broadcast %58 : vector<1x3xf32> to vector<2x3xf32>
    %62 = arith.mulf %60, %61 : vector<2x3xf32>
    %cst_38 = arith.constant 0.000000e+00 : f32
    %cst_39 = arith.constant 1.000000e+00 : f32
    %63 = vector.broadcast %cst_38 : f32 to vector<2x3xf32>
    %64 = arith.maximumf %63, %62 : vector<2x3xf32>
    %65 = vector.broadcast %cst_39 : f32 to vector<2x3xf32>
    %66 = arith.minimumf %65, %64 : vector<2x3xf32>
    %cst_40 = arith.constant -1.000000e+00 : f32
    %67 = vector.broadcast %cst_40 : f32 to vector<2x3xf32>
    %68 = arith.cmpf oeq, %56, %67 : vector<2x3xf32>
    %69 = arith.cmpf one, %56, %56 : vector<2x3xf32>
    %70 = arith.ori %68, %69 : vector<2x3xi1>
    %cst_41 = arith.constant 0.000000e+00 : f32
    %71 = vector.broadcast %cst_41 : f32 to vector<2x3xf32>
    %72 = arith.select %70, %71, %66 : vector<2x3xi1>, vector<2x3xf32>
    %c0_42 = arith.constant 0 : index
    %c0_43 = arith.constant 0 : index
    %c4_44 = arith.constant 4 : index
    %73 = vector.load %arg3[%c0_42, %c0_43, %c4_44] : memref<3x2x128xf32, #tpu.memory_space<vmem>>, vector<1x2x3xf32>
    %74 = vector.shape_cast %73 : vector<1x2x3xf32> to vector<2x3xf32>
    %75 = vector.shape_cast %72 : vector<2x3xf32> to vector<1x2x3xf32>
    tpu.vector_store %arg3[%c0_42, %c0_43, %c4_44], %75 {strides = array<i32>} : memref<3x2x128xf32, #tpu.memory_space<vmem>>, vector<1x2x3xf32>,
    %76 = arith.mulf %72, %72 : vector<2x3xf32>
    %c1_45 = arith.constant 1 : index
    %c0_46 = arith.constant 0 : index
    %c4_47 = arith.constant 4 : index
    %77 = vector.load %arg3[%c1_45, %c0_46, %c4_47] : memref<3x2x128xf32, #tpu.memory_space<vmem>>, vector<1x2x3xf32>
    %78 = vector.shape_cast %77 : vector<1x2x3xf32> to vector<2x3xf32>
    %79 = vector.shape_cast %76 : vector<2x3xf32> to vector<1x2x3xf32>
    tpu.vector_store %arg3[%c1_45, %c0_46, %c4_47], %79 {strides = array<i32>} : memref<3x2x128xf32, #tpu.memory_space<vmem>>, vector<1x2x3xf32>,
    %80 = math.sqrt %72 : vector<2x3xf32>
    %c2_48 = arith.constant 2 : index
    %c0_49 = arith.constant 0 : index
    %c4_50 = arith.constant 4 : index
    %81 = vector.load %arg3[%c2_48, %c0_49, %c4_50] : memref<3x2x128xf32, #tpu.memory_space<vmem>>, vector<1x2x3xf32>
    %82 = vector.shape_cast %81 : vector<1x2x3xf32> to vector<2x3xf32>
    %83 = vector.shape_cast %80 : vector<2x3xf32> to vector<1x2x3xf32>
    tpu.vector_store %arg3[%c2_48, %c0_49, %c4_50], %83 {strides = array<i32>} : memref<3x2x128xf32, #tpu.memory_space<vmem>>, vector<1x2x3xf32>,
    %c0_51 = arith.constant 0 : index
    %c10 = arith.constant 10 : index
    %84 = vector.load %arg1[%c0_51, %c10] : memref<2x16xf32, #tpu.memory_space<vmem>>, vector<2x6xf32>
    %c0_52 = arith.constant 0 : index
    %c7 = arith.constant 7 : index
    %85 = vector.load %arg2[%c0_52, %c7] : memref<2x128xf32, #tpu.memory_space<vmem>>, vector<1x6xf32>
    %c1_53 = arith.constant 1 : index
    %c7_54 = arith.constant 7 : index
    %86 = vector.load %arg2[%c1_53, %c7_54] : memref<2x128xf32, #tpu.memory_space<vmem>>, vector<1x6xf32>
    %87 = vector.broadcast %85 : vector<1x6xf32> to vector<2x6xf32>
    %88 = arith.subf %84, %87 : vector<2x6xf32>
    %89 = vector.broadcast %86 : vector<1x6xf32> to vector<2x6xf32>
    %90 = arith.mulf %88, %89 : vector<2x6xf32>
    %cst_55 = arith.constant 0.000000e+00 : f32
    %cst_56 = arith.constant 1.000000e+00 : f32
    %91 = vector.broadcast %cst_55 : f32 to vector<2x6xf32>
    %92 = arith.maximumf %91, %90 : vector<2x6xf32>
    %93 = vector.broadcast %cst_56 : f32 to vector<2x6xf32>
    %94 = arith.minimumf %93, %92 : vector<2x6xf32>
    %cst_57 = arith.constant -1.000000e+00 : f32
    %95 = vector.broadcast %cst_57 : f32 to vector<2x6xf32>
    %96 = arith.cmpf oeq, %84, %95 : vector<2x6xf32>
    %97 = arith.cmpf one, %84, %84 : vector<2x6xf32>
    %98 = arith.ori %96, %97 : vector<2x6xi1>
    %cst_58 = arith.constant 0.000000e+00 : f32
    %99 = vector.broadcast %cst_58 : f32 to vector<2x6xf32>
    %100 = arith.select %98, %99, %94 : vector<2x6xi1>, vector<2x6xf32>
    %c0_59 = arith.constant 0 : index
    %c0_60 = arith.constant 0 : index
    %c7_61 = arith.constant 7 : index
    %101 = vector.load %arg3[%c0_59, %c0_60, %c7_61] : memref<3x2x128xf32, #tpu.memory_space<vmem>>, vector<1x2x6xf32>
    %102 = vector.shape_cast %101 : vector<1x2x6xf32> to vector<2x6xf32>
    %103 = vector.shape_cast %100 : vector<2x6xf32> to vector<1x2x6xf32>
    tpu.vector_store %arg3[%c0_59, %c0_60, %c7_61], %103 {strides = array<i32>} : memref<3x2x128xf32, #tpu.memory_space<vmem>>, vector<1x2x6xf32>,
    %104 = arith.mulf %100, %100 : vector<2x6xf32>
    %c1_62 = arith.constant 1 : index
    %c0_63 = arith.constant 0 : index
    %c7_64 = arith.constant 7 : index
    %105 = vector.load %arg3[%c1_62, %c0_63, %c7_64] : memref<3x2x128xf32, #tpu.memory_space<vmem>>, vector<1x2x6xf32>
    %106 = vector.shape_cast %105 : vector<1x2x6xf32> to vector<2x6xf32>
    %107 = vector.shape_cast %104 : vector<2x6xf32> to vector<1x2x6xf32>
    tpu.vector_store %arg3[%c1_62, %c0_63, %c7_64], %107 {strides = array<i32>} : memref<3x2x128xf32, #tpu.memory_space<vmem>>, vector<1x2x6xf32>,
    %108 = math.sqrt %100 : vector<2x6xf32>
    %c2_65 = arith.constant 2 : index
    %c0_66 = arith.constant 0 : index
    %c7_67 = arith.constant 7 : index
    %109 = vector.load %arg3[%c2_65, %c0_66, %c7_67] : memref<3x2x128xf32, #tpu.memory_space<vmem>>, vector<1x2x6xf32>
    %110 = vector.shape_cast %109 : vector<1x2x6xf32> to vector<2x6xf32>
    %111 = vector.shape_cast %108 : vector<2x6xf32> to vector<1x2x6xf32>
    tpu.vector_store %arg3[%c2_65, %c0_66, %c7_67], %111 {strides = array<i32>} : memref<3x2x128xf32, #tpu.memory_space<vmem>>, vector<1x2x6xf32>,
    %cst_68 = arith.constant 0.000000e+00 : f32
    %112 = vector.broadcast %cst_68 : f32 to vector<2x115xf32>
    %c0_69 = arith.constant 0 : index
    %c0_70 = arith.constant 0 : index
    %c13 = arith.constant 13 : index
    %113 = vector.load %arg3[%c0_69, %c0_70, %c13] : memref<3x2x128xf32, #tpu.memory_space<vmem>>, vector<1x2x115xf32>
    %114 = vector.shape_cast %113 : vector<1x2x115xf32> to vector<2x115xf32>
    %115 = vector.shape_cast %112 : vector<2x115xf32> to vector<1x2x115xf32>
    tpu.vector_store %arg3[%c0_69, %c0_70, %c13], %115 {strides = array<i32>} : memref<3x2x128xf32, #tpu.memory_space<vmem>>, vector<1x2x115xf32>,
    %c1_71 = arith.constant 1 : index
    %c0_72 = arith.constant 0 : index
    %c13_73 = arith.constant 13 : index
    %116 = vector.load %arg3[%c1_71, %c0_72, %c13_73] : memref<3x2x128xf32, #tpu.memory_space<vmem>>, vector<1x2x115xf32>
    %117 = vector.shape_cast %116 : vector<1x2x115xf32> to vector<2x115xf32>
    %118 = vector.shape_cast %112 : vector<2x115xf32> to vector<1x2x115xf32>
    tpu.vector_store %arg3[%c1_71, %c0_72, %c13_73], %118 {strides = array<i32>} : memref<3x2x128xf32, #tpu.memory_space<vmem>>, vector<1x2x115xf32>,
    %c2_74 = arith.constant 2 : index
    %c0_75 = arith.constant 0 : index
    %c13_76 = arith.constant 13 : index
    %119 = vector.load %arg3[%c2_74, %c0_75, %c13_76] : memref<3x2x128xf32, #tpu.memory_space<vmem>>, vector<1x2x115xf32>
    %120 = vector.shape_cast %119 : vector<1x2x115xf32> to vector<2x115xf32>
    %121 = vector.shape_cast %112 : vector<2x115xf32> to vector<1x2x115xf32>
    tpu.vector_store %arg3[%c2_74, %c0_75, %c13_76], %121 {strides = array<i32>} : memref<3x2x128xf32, #tpu.memory_space<vmem>>, vector<1x2x115xf32>,
    return
  }
  func.func @transform_0(%arg0: i32) -> (i32, i32) {
    %c0_i32 = arith.constant 0 : i32
    %c0_i32_0 = arith.constant 0 : i32
    return %arg0, %c0_i32 : i32, i32
  }
  func.func @transform_1(%arg0: i32) -> (i32, i32) {
    %c0_i32 = arith.constant 0 : i32
    %c0_i32_0 = arith.constant 0 : i32
    %c0_i32_1 = arith.constant 0 : i32
    return %c0_i32, %c0_i32_0 : i32, i32
  }
  func.func @transform_2(%arg0: i32) -> (i32, i32, i32) {
    %c0_i32 = arith.constant 0 : i32
    %c0_i32_0 = arith.constant 0 : i32
    %c0_i32_1 = arith.constant 0 : i32
    return %c0_i32, %arg0, %c0_i32_0 : i32, i32, i32
  }
}

</mosaic_0001>

<llo_original>
// kernel: tpu_custom_call.1
$region0: #{tpu_custom_call.1}
  #allocation0 [shape = 'u32[]', space=smem, size = 0x4, offset = 0x4, fixed_abs, tag = 'smem constant byte address 0x4 - core index']
  #allocation1 [shape = 'u32[144,128]{1,0:T(1,128)}', space=vmem, size = 0x12000, scoped, tag = 'internal scratch']
  %s0 = inlined_call_operand.hbm [shape: f32[2,16], index: 0, kind: input, shape index: {}]
  %s1 = inlined_call_operand.vmem [shape: f32[2,128], index: 1, kind: input, shape index: {}]
  %s2 = inlined_call_operand.hbm [shape: f32[3,2,128], index: 2, kind: output, shape index: {}]
  %s3 = sld [smem:[#allocation0]]
  $region22: #{tpu_custom_call.1} parent=0
    _
  %s5 = ssub.s32 1, %s3
  %s6 = scalar_select 0, %s5, %s3
  $region1: #{tpu_custom_call.1} parent=0
    #allocation2 [shape = 'u8[1024]{0}', space=vmem, size = 0x400, scoped, tag = 'input window, operand 0, single buffered']
    #allocation3 [shape = 's32[1]{0}', space=sflag, size = 0x4, scoped, tag = 'scoped memory for tpu_custom_call.1']
    #allocation4 [shape = 's32[1]{0}', space=sflag, size = 0x4, scoped, tag = 'scoped memory for tpu_custom_call.1']
    #allocation5 [shape = 'u8[3072]{0}', space=vmem, size = 0xc00, scoped, tag = 'output window, operand 0, single buffered']
    %7 = vsyncpa [#allocation3], 0
    %8 = vsyncpa [#allocation4], 0
    // Predicated region
    $region2: #{tpu_custom_call.1} parent=1 // pred_check
      _
    $region3: #{tpu_custom_call.1} parent=1 // pred_check_branch
      %10 = sbr.rel (0) target = $region5
    $region4: #{tpu_custom_call.1} parent=1 // pred_region
      %s12 = ssub.s32 32, 32
      %13 = vsyncadd [#allocation3], %s12
      %s15 = sshll.u32 [#allocation2], 4
      %s16 = int_to_ptr.vmem [resolvable:$true] %s15
      %18 = dma.hbm_to_vmem [thread:$0]  %s0, 32, %s16, [#allocation3]
    $region5: #{tpu_custom_call.1} parent=1 // pred_fallthru
      _
    // Predicated region
    $region6: #{tpu_custom_call.1} parent=1 // pred_check
      _
    $region7: #{tpu_custom_call.1} parent=1 // pred_check_branch
      %20 = sbr.rel (0) target = $region9
    $region8: #{tpu_custom_call.1} parent=1 // pred_region
      _
    $region9: #{tpu_custom_call.1} parent=1 // pred_fallthru
      _
    // Predicated region
    $region10: #{tpu_custom_call.1} parent=1 // pred_check
      _
    $region11: #{tpu_custom_call.1} parent=1 // pred_check_branch
      %22 = sbr.rel (0) target = $region13
    $region12: #{tpu_custom_call.1} parent=1 // pred_region
      %23 = dma.done [#allocation3], 32
    $region13: #{tpu_custom_call.1} parent=1 // pred_fallthru
      _
    %v24 = vld [vmem:[#allocation2] sm:$0x3]
    %v25 = vld [vmem:[%s1] sm:$0x1]
    %v26 = vld [vmem:[%s1 + $0x1] sm:$0x1]
    %v27 = vlaneseq
    %v28 = vshrl.u32 %v27, 7
    %v29 = vsub.s32 0, %v28
    %v30 = vrot.slane %v25, %v29
    %v31 = vsub.f32 %v24, %v30
    %v32 = vlaneseq
    %v33 = vshrl.u32 %v32, 7
    %v34 = vsub.s32 0, %v33
    %v35 = vrot.slane %v26, %v34
    %v36 = vmul.f32 %v31, %v35
    %v37 = vmax.f32 %v36, 0.0
    %v38 = vmin.f32 %v37, 1.0
    %vm39 = vcmp.eq.f32.partialorder %v24, -1.0
    %vm40 = vcmp.ne.f32.partialorder %v24, %v24
    %vm41 = vmor %vm39, %vm40
    %v42 = vsel %vm41, 0.0, %v38
    %vm43 = vcmask 1024
    %44 = vst.msk [vmem:[#allocation5] sm:$0x3] %vm43, %v42
    %v45 = vmul.f32 %v42, %v42
    %s46 = scalar_lea.vmem [#allocation5], 2
    %47 = vst.msk [vmem:[%s46] sm:$0x3] %vm43, %v45
    %v48 = vrsqrt.pop %v42
    %v49 = vmul.f32 %v42, %v48
    %vm50 = vcmp.eq.f32.partialorder %v42, inf
    %v51 = vsel %vm50, %v42, %v49
    %vm52 = vcmp.eq.f32.partialorder %v42, 0.0
    %v53 = vand.u32 %v42, 2147483648
    %v54 = vsel %vm52, %v53, %v51
    %s55 = scalar_lea.vmem [#allocation5], 4
    %56 = vst.msk [vmem:[%s55] sm:$0x3] %vm43, %v54
    %v57 = vld [vmem:[#allocation2] sm:$0x3]
    %v58 = vld [vmem:[%s1] sm:$0x1]
    %v59 = vld [vmem:[%s1 + $0x1] sm:$0x1]
    %v60 = vlaneseq
    %v61 = vshrl.u32 %v60, 7
    %v62 = vsub.s32 0, %v61
    %v63 = vrot.slane %v58, %v62
    %65 = vrot.lane.b32.xlu0 %v63, 1
    %v66 = vpop.permute.xlu0 %65
    %v68 = vsub.f32 %v57, %v66
    %v69 = vlaneseq
    %v70 = vshrl.u32 %v69, 7
    %v71 = vsub.s32 0, %v70
    %v72 = vrot.slane %v59, %v71
    %74 = vrot.lane.b32.xlu0 %v72, 1
    %v75 = vpop.permute.xlu0 %74
    %v77 = vmul.f32 %v68, %v75
    %v78 = vmax.f32 %v77, 0.0
    %v79 = vmin.f32 %v78, 1.0
    %vm80 = vcmp.eq.f32.partialorder %v57, -1.0
    %vm81 = vcmp.ne.f32.partialorder %v57, %v57
    %vm82 = vmor %vm80, %vm81
    %v83 = vsel %vm82, 0.0, %v79
    %85 = vrot.lane.b32.xlu0 %v83, 127
    %v86 = vpop.permute.xlu0 %85
    %vm88 = vcmask 25608
    %89 = vst.msk [vmem:[#allocation5] sm:$0x3] %vm88, %v86
    %v90 = vmul.f32 %v83, %v83
    %92 = vrot.lane.b32.xlu0 %v90, 127
    %v93 = vpop.permute.xlu0 %92
    %95 = vst.msk [vmem:[%s46] sm:$0x3] %vm88, %v93
    %v96 = vrsqrt.pop %v83
    %v97 = vmul.f32 %v83, %v96
    %vm98 = vcmp.eq.f32.partialorder %v83, inf
    %v99 = vsel %vm98, %v83, %v97
    %vm100 = vcmp.eq.f32.partialorder %v83, 0.0
    %v101 = vand.u32 %v83, 2147483648
    %v102 = vsel %vm100, %v101, %v99
    %104 = vrot.lane.b32.xlu0 %v102, 127
    %v105 = vpop.permute.xlu0 %104
    %107 = vst.msk [vmem:[%s55] sm:$0x3] %vm88, %v105
    %v108 = vld [vmem:[#allocation2] sm:$0x3]
    %v109 = vld [vmem:[%s1] sm:$0x1]
    %v110 = vld [vmem:[%s1 + $0x1] sm:$0x1]
    %v111 = vlaneseq
    %v112 = vshrl.u32 %v111, 7
    %v113 = vsub.s32 0, %v112
    %v114 = vrot.slane %v109, %v113
    %116 = vrot.lane.b32.xlu0 %v114, 2
    %v117 = vpop.permute.xlu0 %116
    %v119 = vsub.f32 %v108, %v117
    %v120 = vlaneseq
    %v121 = vshrl.u32 %v120, 7
    %v122 = vsub.s32 0, %v121
    %v123 = vrot.slane %v110, %v122
    %125 = vrot.lane.b32.xlu0 %v123, 2
    %v126 = vpop.permute.xlu0 %125
    %v128 = vmul.f32 %v119, %v126
    %v129 = vmax.f32 %v128, 0.0
    %v130 = vmin.f32 %v129, 1.0
    %vm131 = vcmp.eq.f32.partialorder %v108, -1.0
    %vm132 = vcmp.ne.f32.partialorder %v108, %v108
    %vm133 = vmor %vm131, %vm132
    %v134 = vsel %vm133, 0.0, %v130
    %136 = vrot.lane.b32.xlu0 %v134, 126
    %v137 = vpop.permute.xlu0 %136
    %vm139 = vcmask 50208
    %140 = vst.msk [vmem:[#allocation5] sm:$0x3] %vm139, %v137
    %v141 = vmul.f32 %v134, %v134
    %143 = vrot.lane.b32.xlu0 %v141, 126
    %v144 = vpop.permute.xlu0 %143
    %146 = vst.msk [vmem:[%s46] sm:$0x3] %vm139, %v144
    %v147 = vrsqrt.pop %v134
    %v148 = vmul.f32 %v134, %v147
    %vm149 = vcmp.eq.f32.partialorder %v134, inf
    %v150 = vsel %vm149, %v134, %v148
    %vm151 = vcmp.eq.f32.partialorder %v134, 0.0
    %v152 = vand.u32 %v134, 2147483648
    %v153 = vsel %vm151, %v152, %v150
    %155 = vrot.lane.b32.xlu0 %v153, 126
    %v156 = vpop.permute.xlu0 %155
    %158 = vst.msk [vmem:[%s55] sm:$0x3] %vm139, %v156
    %v159 = vld [vmem:[#allocation2] sm:$0x3]
    %v160 = vld [vmem:[%s1] sm:$0x1]
    %v161 = vld [vmem:[%s1 + $0x1] sm:$0x1]
    %v162 = vlaneseq
    %v163 = vshrl.u32 %v162, 7
    %v164 = vsub.s32 0, %v163
    %v165 = vrot.slane %v160, %v164
    %167 = vrot.lane.b32.xlu0 %v165, 3
    %v168 = vpop.permute.xlu0 %167
    %v170 = vsub.f32 %v159, %v168
    %v171 = vlaneseq
    %v172 = vshrl.u32 %v171, 7
    %v173 = vsub.s32 0, %v172
    %v174 = vrot.slane %v161, %v173
    %176 = vrot.lane.b32.xlu0 %v174, 3
    %v177 = vpop.permute.xlu0 %176
    %v179 = vmul.f32 %v170, %v177
    %v180 = vmax.f32 %v179, 0.0
    %v181 = vmin.f32 %v180, 1.0
    %vm182 = vcmp.eq.f32.partialorder %v159, -1.0
    %vm183 = vcmp.ne.f32.partialorder %v159, %v159
    %vm184 = vmor %vm182, %vm183
    %v185 = vsel %vm184, 0.0, %v181
    %187 = vrot.lane.b32.xlu0 %v185, 125
    %v188 = vpop.permute.xlu0 %187
    %vm190 = vcmask 99384
    %191 = vst.msk [vmem:[#allocation5] sm:$0x3] %vm190, %v188
    %v192 = vmul.f32 %v185, %v185
    %194 = vrot.lane.b32.xlu0 %v192, 125
    %v195 = vpop.permute.xlu0 %194
    %197 = vst.msk [vmem:[%s46] sm:$0x3] %vm190, %v195
    %v198 = vrsqrt.pop %v185
    %v199 = vmul.f32 %v185, %v198
    %vm200 = vcmp.eq.f32.partialorder %v185, inf
    %v201 = vsel %vm200, %v185, %v199
    %vm202 = vcmp.eq.f32.partialorder %v185, 0.0
    %v203 = vand.u32 %v185, 2147483648
    %v204 = vsel %vm202, %v203, %v201
    %206 = vrot.lane.b32.xlu0 %v204, 125
    %v207 = vpop.permute.xlu0 %206
    %209 = vst.msk [vmem:[%s55] sm:$0x3] %vm190, %v207
    %vm210 = vcmask 1041512
    %211 = vst.msk [vmem:[#allocation5] sm:$0x3] %vm210, 0.0
    %212 = vst.msk [vmem:[%s46] sm:$0x3] %vm210, 0.0
    %213 = vst.msk [vmem:[%s55] sm:$0x3] %vm210, 0.0
    // Predicated region
    $region14: #{tpu_custom_call.1} parent=1 // pred_check
      _
    $region15: #{tpu_custom_call.1} parent=1 // pred_check_branch
      %215 = sbr.rel (0) target = $region17
    $region16: #{tpu_custom_call.1} parent=1 // pred_region
      %s217 = ssub.s32 96, 96
      %218 = vsyncadd [#allocation4], %s217
      %s219 = sshll.u32 [#allocation5], 4
      %s220 = int_to_ptr.vmem [resolvable:$true] %s219
      %225 = dma.vmem_to_hbm [thread:$0]  %s220, 96, %s2, [#allocation4], 32, 32, 2
    $region17: #{tpu_custom_call.1} parent=1 // pred_fallthru
      _
    // Predicated region
    $region18: #{tpu_custom_call.1} parent=1 // pred_check
      _
    $region19: #{tpu_custom_call.1} parent=1 // pred_check_branch
      %227 = sbr.rel (0) target = $region21
    $region20: #{tpu_custom_call.1} parent=1 // pred_region
      %228 = dma.done [#allocation4], 96
    $region21: #{tpu_custom_call.1} parent=1 // pred_fallthru
      _
    %229 = vsyncpa [#allocation3], 1
    %230 = vsyncpa [#allocation4], 1

</llo_original>
